<compile_context>
chip_gen: v5e
topology: v5e:2x2
jax: 0.10.0
libtpu: 0.0.40
codegen_flags: <defaults>
</compile_context>

<pallas_src>
import jax
import jax.numpy as jnp
import numpy as np
from jax.experimental import pallas as pl
from jax.experimental.pallas import tpu as pltpu


# ------------------------- hardware introspection ---------------------------

def _tpu_profile():
    """Return (working_set_budget_bytes, physical_vmem_bytes, tensorcores_per_chip).

    Budget bounds the *double-buffered* per-grid-step working set (in + out).
    Keyed off pltpu.get_tpu_info() when available, else the device_kind string,
    else a conservative default that is safe on every generation.
    """
    kind = ""
    try:
        kind = str(jax.devices()[0].device_kind).lower()
    except Exception:
        pass

    phys = None
    try:
        cap = getattr(pltpu.get_tpu_info(), "vmem_capacity_bytes", None)
        if cap:
            phys = int(cap)
    except Exception:
        phys = None

    # v7x has 2 TensorCores per chip; v5e/v6e have 1 (the grid is a sequential loop).
    num_tc = 2 if "v7" in kind else 1

    known_gen = (phys is not None) or any(g in kind for g in ("v5", "v6", "v7"))
    if phys is None:
        if "v7" in kind:
            phys = 64 << 20          # 64 MiB VMEM per TensorCore
        elif "v6" in kind or "v5" in kind:
            phys = 128 << 20
        else:
            phys = 64 << 20          # conservative guess

    if known_gen:
        # ~5/8 of physical, capped at 64 MiB:
        #   128 MiB chips (v5e/v6e) -> 64 MiB budget, v7x (64 MiB) -> 40 MiB budget.
        budget = min((phys * 5) // 8, 64 << 20)
    else:
        budget = 24 << 20            # safe everywhere
    return budget, phys, num_tc


def _round_up(x, mult):
    return ((x + mult - 1) // mult) * mult


def _pick_col_tile(s, itemsize, budget, sublane):
    """Largest divisor of S that is a multiple of 128 and still fits >=sublane rows."""
    for cand in range(s, 127, -128):
        if s % cand == 0 and budget >= 12 * cand * itemsize * sublane:
            return cand
    return 128  # always divides S (S % 128 == 0) and always fits


def _pick_row_tile(m, cols_per_step, itemsize, budget, sublane, num_tc):
    """Row tile so that the double-buffered working set stays within budget.

    cols_per_step = total resident columns per row per grid step (inputs + outputs).
    Returns None if even `sublane` rows do not fit (caller must column-tile).
    """
    per_row = 2 * cols_per_step * itemsize          # x2: double-buffered pipeline
    rows_fit = budget // per_row

    if rows_fit >= m:
        tm = m
        # Only split when the chip actually has 2 TensorCores (v7x megacore);
        # on single-TC v5e/v6e an extra grid step is pure per-step overhead.
        if num_tc >= 2 and m >= 2 * sublane:
            tm = _round_up(pl.cdiv(m, 2), sublane)
    elif rows_fit >= sublane:
        tm = (int(rows_fit) // sublane) * sublane
    else:
        return None

    # Keep the step count even on 2-TC chips so both cores stay load balanced.
    if num_tc >= 2 and tm < m:
        steps = pl.cdiv(m, tm)
        if steps > 1 and steps % 2 == 1:
            tm2 = _round_up(pl.cdiv(m, steps + 1), sublane)
            if tm2 >= sublane and pl.cdiv(m, tm2) % 2 == 0:
                tm = tm2
    return int(tm)


# --------------------------------- kernels -----------------------------------

def _skip_split_halves_kernel(uc_l_ref, uc_r_ref, lc_l_ref, lc_r_ref,
                              uc_out_ref, lc_out_ref):
    # x @ cat([I, I], dim=0) == x[:, :S] + x[:, S:].  The column split was done
    # by the BlockSpecs (DMA), so this is a pure lane-aligned VPU add.
    uc_out_ref[...] = uc_l_ref[...] + uc_r_ref[...]
    lc_out_ref[...] = lc_l_ref[...] + lc_r_ref[...]


def _skip_split_fullwidth_kernel(uc_ref, lc_ref, uc_out_ref, lc_out_ref):
    # Fallback for S % 128 != 0: full-width block, split in-kernel.
    s = uc_out_ref.shape[-1]
    uc = uc_ref[...]
    lc = lc_ref[...]
    uc_out_ref[...] = uc[:, :s] + uc[:, s:]
    lc_out_ref[...] = lc[:, :s] + lc[:, s:]


# --------------------------------- wrapper -----------------------------------

def skip_split_backsubstitute(uc, lc, uc_bias, lc_bias):
    """Pallas implementation of VerifySkipSplit.backsubstitute.

    uc, lc: (M, 2S) constraint matrices.  uc_bias, lc_bias: (M,).
    Returns (new_uc, new_lc, new_uc_bias, new_lc_bias); new_uc/new_lc are (M, S).
    """
    m, two_s = uc.shape
    assert two_s % 2 == 0, "skip-split expects an even number of input columns (2*size)"
    assert lc.shape == (m, two_s)
    s = two_s // 2

    itemsize = np.dtype(uc.dtype).itemsize
    sublane = max(8, 32 // itemsize)          # 8 f32, 16 bf16, 32 int8/fp8
    budget, phys, num_tc = _tpu_profile()

    out_sds = jax.ShapeDtypeStruct((m, s), uc.dtype)

    if s % 128 == 0:
        # Lane-aligned path: column split expressed in the BlockSpecs, with
        # column tiling so arbitrarily wide S stays within the VMEM budget.
        tc = _pick_col_tile(s, itemsize, budget, sublane)
        n_col = s // tc
        tm = _pick_row_tile(m, 6 * tc, itemsize, budget, sublane, num_tc)
        assert tm is not None  # >= sublane rows always fit at the chosen tc

        grid = (pl.cdiv(m, tm), n_col)
        left_spec = pl.BlockSpec((tm, tc), lambda i, j: (i, j))
        right_spec = pl.BlockSpec((tm, tc), lambda i, j: (i, j + n_col))
        out_spec = pl.BlockSpec((tm, tc), lambda i, j: (i, j))
        in_specs = [left_spec, right_spec, left_spec, right_spec]
        operands = (uc, uc, lc, lc)           # each spec DMAs a disjoint half
        kernel = _skip_split_halves_kernel
        dims = ("parallel", "parallel")
        working_set = 12 * tm * tc * itemsize
    else:
        # Unaligned-S fallback: full (lane-dense) last dim, split in-kernel.
        tm = _pick_row_tile(m, 6 * s, itemsize, budget, sublane, num_tc)
        if tm is None:
            # TODO(synk): column-tiled fallback for extremely wide non-128-aligned
            # S (would need masked two-block column reads); use minimal rows.
            tm = min(m, sublane)
        grid = (pl.cdiv(m, tm),)
        in_spec = pl.BlockSpec((tm, two_s), lambda i: (i, 0))
        out_spec = pl.BlockSpec((tm, s), lambda i: (i, 0))
        in_specs = [in_spec, in_spec]
        operands = (uc, lc)
        kernel = _skip_split_fullwidth_kernel
        dims = ("parallel",)
        working_set = 12 * tm * s * itemsize

    vmem_limit = int(min(phys - (4 << 20), working_set + (16 << 20)))
    vmem_limit = max(vmem_limit, 16 << 20)

    new_uc, new_lc = pl.pallas_call(
        kernel,
        grid=grid,
        in_specs=in_specs,
        out_specs=[out_spec, out_spec],
        out_shape=[out_sds, out_sds],
        compiler_params=pltpu.CompilerParams(
            dimension_semantics=dims,
            vmem_limit_bytes=vmem_limit,
        ),
    )(*operands)

    # The skip-split layer's bias is identically zero, so
    #   uc_bias + uc @ 0 == uc_bias (exact) -> pass through, zero HBM traffic.
    return new_uc, new_lc, uc_bias, lc_bias


# --------------------------------- reference ---------------------------------

def skip_split_backsubstitute_reference(uc, lc, uc_bias, lc_bias):
    """Pure-JAX oracle mirroring the PyTorch code path (dense W = cat([I, I], 0))."""
    m, two_s = uc.shape
    s = two_s // 2
    eye = jnp.eye(s, dtype=uc.dtype)
    w = jnp.concatenate([eye, eye], axis=0)        # (2S, S)
    b = jnp.zeros((two_s,), uc.dtype)
    hi = jax.lax.Precision.HIGHEST
    new_uc = jnp.dot(uc, w, precision=hi)
    new_lc = jnp.dot(lc, w, precision=hi)
    return new_uc, new_lc, uc_bias + uc @ b, lc_bias + lc @ b


# ----------------------------------- demo ------------------------------------

if __name__ == "__main__":
    def run_case(key, m, s):
        k1, k2, k3, k4 = jax.random.split(key, 4)
        uc = jax.random.normal(k1, (m, 2 * s), jnp.float32)
        lc = jax.random.normal(k2, (m, 2 * s), jnp.float32)
        uc_b = jax.random.normal(k3, (m,), jnp.float32)
        lc_b = jax.random.normal(k4, (m,), jnp.float32)

        outs = jax.block_until_ready(skip_split_backsubstitute(uc, lc, uc_b, lc_b))
        refs = skip_split_backsubstitute_reference(uc, lc, uc_b, lc_b)
        for o, r in zip(outs, refs):
            np.testing.assert_allclose(np.asarray(o), np.asarray(r),
                                       rtol=1e-5, atol=1e-5)
        # Bias update is an exact no-op (zero-bias layer).
        assert bool(jnp.all(outs[2] == uc_b))
        assert bool(jnp.all(outs[3] == lc_b))

    root = jax.random.PRNGKey(0)
    k_a, k_b = jax.random.split(root, 2)
    run_case(k_a, m=128, s=256)   # lane-aligned S: BlockSpec column-split path
    run_case(k_b, m=513, s=128)   # ragged row count (exercises v7x 2-step split)

    print("KERNEL_OK")
</pallas_src>

<mosaic_0001>
module attributes {stable_mosaic.version = 11 : i64} {
  func.func @_skip_split_halves_kernel(%arg0: i32, %arg1: i32, %arg2: memref<128x256xf32, #tpu.memory_space<vmem>>, %arg3: memref<128x256xf32, #tpu.memory_space<vmem>>, %arg4: memref<128x256xf32, #tpu.memory_space<vmem>>, %arg5: memref<128x256xf32, #tpu.memory_space<vmem>>, %arg6: memref<128x256xf32, #tpu.memory_space<vmem>>, %arg7: memref<128x256xf32, #tpu.memory_space<vmem>>) attributes {dimension_semantics = [#tpu.dimension_semantics<parallel>, #tpu.dimension_semantics<parallel>], iteration_bounds = array<i64: 1, 1>, scalar_prefetch = 0 : i64, scratch_operands = 0 : i64, tpu.core_type = #tpu.core_type<tc>, window_params = [{transform_indices = @transform_0, window_bounds = array<i64: 128, 256>}, {transform_indices = @transform_1, window_bounds = array<i64: 128, 256>}, {transform_indices = @transform_2, window_bounds = array<i64: 128, 256>}, {transform_indices = @transform_3, window_bounds = array<i64: 128, 256>}, {transform_indices = @transform_4, window_bounds = array<i64: 128, 256>}, {transform_indices = @transform_5, window_bounds = array<i64: 128, 256>}]} {
    %c0 = arith.constant 0 : index
    %c0_0 = arith.constant 0 : index
    %0 = vector.load %arg2[%c0, %c0_0] : memref<128x256xf32, #tpu.memory_space<vmem>>, vector<128x256xf32>
    %c0_1 = arith.constant 0 : index
    %c0_2 = arith.constant 0 : index
    %1 = vector.load %arg3[%c0_1, %c0_2] : memref<128x256xf32, #tpu.memory_space<vmem>>, vector<128x256xf32>
    %2 = arith.addf %0, %1 : vector<128x256xf32>
    %c0_3 = arith.constant 0 : index
    %c0_4 = arith.constant 0 : index
    %3 = vector.load %arg6[%c0_3, %c0_4] : memref<128x256xf32, #tpu.memory_space<vmem>>, vector<128x256xf32>
    tpu.vector_store %arg6[%c0_3, %c0_4], %2 {strides = array<i32>} : memref<128x256xf32, #tpu.memory_space<vmem>>, vector<128x256xf32>,
    %c0_5 = arith.constant 0 : index
    %c0_6 = arith.constant 0 : index
    %4 = vector.load %arg4[%c0_5, %c0_6] : memref<128x256xf32, #tpu.memory_space<vmem>>, vector<128x256xf32>
    %c0_7 = arith.constant 0 : index
    %c0_8 = arith.constant 0 : index
    %5 = vector.load %arg5[%c0_7, %c0_8] : memref<128x256xf32, #tpu.memory_space<vmem>>, vector<128x256xf32>
    %6 = arith.addf %4, %5 : vector<128x256xf32>
    %c0_9 = arith.constant 0 : index
    %c0_10 = arith.constant 0 : index
    %7 = vector.load %arg7[%c0_9, %c0_10] : memref<128x256xf32, #tpu.memory_space<vmem>>, vector<128x256xf32>
    tpu.vector_store %arg7[%c0_9, %c0_10], %6 {strides = array<i32>} : memref<128x256xf32, #tpu.memory_space<vmem>>, vector<128x256xf32>,
    return
  }
  func.func @transform_0(%arg0: i32, %arg1: i32) -> (i32, i32) {
    %c0_i32 = arith.constant 0 : i32
    return %arg0, %arg1 : i32, i32
  }
  func.func @transform_1(%arg0: i32, %arg1: i32) -> (i32, i32) {
    %c1_i32 = arith.constant 1 : i32
    %0 = arith.addi %arg1, %c1_i32 : i32
    %c0_i32 = arith.constant 0 : i32
    return %arg0, %0 : i32, i32
  }
  func.func @transform_2(%arg0: i32, %arg1: i32) -> (i32, i32) {
    %c0_i32 = arith.constant 0 : i32
    return %arg0, %arg1 : i32, i32
  }
  func.func @transform_3(%arg0: i32, %arg1: i32) -> (i32, i32) {
    %c1_i32 = arith.constant 1 : i32
    %0 = arith.addi %arg1, %c1_i32 : i32
    %c0_i32 = arith.constant 0 : i32
    return %arg0, %0 : i32, i32
  }
  func.func @transform_4(%arg0: i32, %arg1: i32) -> (i32, i32) {
    %c0_i32 = arith.constant 0 : i32
    return %arg0, %arg1 : i32, i32
  }
  func.func @transform_5(%arg0: i32, %arg1: i32) -> (i32, i32) {
    %c0_i32 = arith.constant 0 : i32
    return %arg0, %arg1 : i32, i32
  }
}

</mosaic_0001>

<llo_original>
// kernel: tpu_custom_call.1
$region0: #{tpu_custom_call.1}
  #allocation0 [shape = 'u32[]', space=smem, size = 0x4, offset = 0x4, fixed_abs, tag = 'smem constant byte address 0x4 - core index']
  #allocation1 [shape = 'u32[72,128]{1,0:T(1,128)}', space=vmem, size = 0x9000, scoped, tag = 'internal scratch']
  %s0 = inlined_call_operand.hbm [shape: f32[128,512], index: 0, kind: input, shape index: {}]
  %s1 = inlined_call_operand.hbm [shape: f32[128,512], index: 1, kind: input, shape index: {}]
  %s2 = inlined_call_operand.hbm [shape: f32[128,512], index: 2, kind: input, shape index: {}]
  %s3 = inlined_call_operand.hbm [shape: f32[128,512], index: 3, kind: input, shape index: {}]
  %s4 = inlined_call_operand.hbm [shape: f32[128,256], index: 4, kind: output, shape index: {0}]
  %s5 = inlined_call_operand.hbm [shape: f32[128,256], index: 5, kind: output, shape index: {1}]
  %6 = xla_tuple %s4, %s5
  %s7 = sld [smem:[#allocation0]]
  $region50: #{tpu_custom_call.1} parent=0
    _
  %s9 = ssub.s32 1, %s7
  %s10 = scalar_select 0, %s9, %s7
  $region1: #{tpu_custom_call.1} parent=0
    #allocation2 [shape = 'u8[131072]{0}', space=vmem, size = 0x20000, scoped, tag = 'input window, operand 0, single buffered']
    #allocation3 [shape = 's32[1]{0}', space=sflag, size = 0x4, scoped, tag = 'scoped memory for tpu_custom_call.1']
    #allocation4 [shape = 's32[1]{0}', space=sflag, size = 0x4, scoped, tag = 'scoped memory for tpu_custom_call.1']
    #allocation5 [shape = 'u8[131072]{0}', space=vmem, size = 0x20000, scoped, tag = 'input window, operand 1, single buffered']
    #allocation6 [shape = 's32[1]{0}', space=sflag, size = 0x4, scoped, tag = 'scoped memory for tpu_custom_call.1']
    #allocation7 [shape = 'u8[131072]{0}', space=vmem, size = 0x20000, scoped, tag = 'input window, operand 2, single buffered']
    #allocation8 [shape = 'u8[131072]{0}', space=vmem, size = 0x20000, scoped, tag = 'input window, operand 3, single buffered']
    #allocation9 [shape = 's32[1]{0}', space=sflag, size = 0x4, scoped, tag = 'scoped memory for tpu_custom_call.1']
    #allocation10 [shape = 'u8[131072]{0}', space=vmem, size = 0x20000, scoped, tag = 'output window, operand 0, single buffered']
    #allocation11 [shape = 'u8[131072]{0}', space=vmem, size = 0x20000, scoped, tag = 'output window, operand 1, single buffered']
    #allocation12 [shape = 's32[1]{0}', space=sflag, size = 0x4, scoped, tag = 'scoped memory for tpu_custom_call.1']
    %11 = vsyncpa [#allocation3], 0
    %12 = vsyncpa [#allocation6], 0
    %13 = vsyncpa [#allocation9], 0
    %14 = vsyncpa [#allocation4], 0
    %15 = vsyncpa [#allocation12], 0
    // Predicated region
    $region2: #{tpu_custom_call.1} parent=1 // pred_check
      _
    $region3: #{tpu_custom_call.1} parent=1 // pred_check_branch
      %17 = sbr.rel (0) target = $region5
    $region4: #{tpu_custom_call.1} parent=1 // pred_region
      %19 = vsyncadd [#allocation3], 0
      %s20 = sshll.u32 %s0, 4
      %s21 = int_to_ptr.hbm [resolvable:$true] %s20
      %s22 = sshll.u32 [#allocation2], 4
      %s23 = int_to_ptr.vmem [resolvable:$true] %s22
      %28 = dma.hbm_to_vmem [thread:$0]  %s21, 4096, %s23, [#allocation3], 512, 256, 16
    $region5: #{tpu_custom_call.1} parent=1 // pred_fallthru
      _
    // Predicated region
    $region6: #{tpu_custom_call.1} parent=1 // pred_check
      _
    $region7: #{tpu_custom_call.1} parent=1 // pred_check_branch
      %30 = sbr.rel (0) target = $region9
    $region8: #{tpu_custom_call.1} parent=1 // pred_region
      %s31 = sadd.s32 0, 1
      %s32 = smul.u32 2, %s31
      %34 = vsyncadd [#allocation6], 0
      %s35 = smul.addr %s32, 8
      %s36 = scalar_lea.hbm %s1, %s35
      %s37 = sshll.u32 %s36, 4
      %s38 = int_to_ptr.hbm [resolvable:$true] %s37
      %s39 = sshll.u32 [#allocation5], 4
      %s40 = int_to_ptr.vmem [resolvable:$true] %s39
      %45 = dma.hbm_to_vmem [thread:$0]  %s38, 4096, %s40, [#allocation6], 512, 256, 16
    $region9: #{tpu_custom_call.1} parent=1 // pred_fallthru
      _
    // Predicated region
    $region10: #{tpu_custom_call.1} parent=1 // pred_check
      _
    $region11: #{tpu_custom_call.1} parent=1 // pred_check_branch
      %47 = sbr.rel (0) target = $region13
    $region12: #{tpu_custom_call.1} parent=1 // pred_region
      %49 = vsyncadd [#allocation6], 0
      %s50 = sshll.u32 %s2, 4
      %s51 = int_to_ptr.hbm [resolvable:$true] %s50
      %s52 = sshll.u32 [#allocation7], 4
      %s53 = int_to_ptr.vmem [resolvable:$true] %s52
      %58 = dma.hbm_to_vmem [thread:$0]  %s51, 4096, %s53, [#allocation6], 512, 256, 16
    $region13: #{tpu_custom_call.1} parent=1 // pred_fallthru
      _
    // Predicated region
    $region14: #{tpu_custom_call.1} parent=1 // pred_check
      _
    $region15: #{tpu_custom_call.1} parent=1 // pred_check_branch
      %60 = sbr.rel (0) target = $region17
    $region16: #{tpu_custom_call.1} parent=1 // pred_region
      %s61 = sadd.s32 0, 1
      %s62 = smul.u32 2, %s61
      %64 = vsyncadd [#allocation9], 0
      %s65 = smul.addr %s62, 8
      %s66 = scalar_lea.hbm %s3, %s65
      %s67 = sshll.u32 %s66, 4
      %s68 = int_to_ptr.hbm [resolvable:$true] %s67
      %s69 = sshll.u32 [#allocation8], 4
      %s70 = int_to_ptr.vmem [resolvable:$true] %s69
      %75 = dma.hbm_to_vmem [thread:$0]  %s68, 4096, %s70, [#allocation9], 512, 256, 16
    $region17: #{tpu_custom_call.1} parent=1 // pred_fallthru
      _
    // Predicated region
    $region18: #{tpu_custom_call.1} parent=1 // pred_check
      _
    $region19: #{tpu_custom_call.1} parent=1 // pred_check_branch
      %77 = sbr.rel (0) target = $region21
    $region20: #{tpu_custom_call.1} parent=1 // pred_region
      %79 = dma.done [#allocation3], 4096
    $region21: #{tpu_custom_call.1} parent=1 // pred_fallthru
      _
    // Predicated region
    $region22: #{tpu_custom_call.1} parent=1 // pred_check
      _
    $region23: #{tpu_custom_call.1} parent=1 // pred_check_branch
      %81 = sbr.rel (0) target = $region25
    $region24: #{tpu_custom_call.1} parent=1 // pred_region
      %83 = dma.done [#allocation6], 4096
    $region25: #{tpu_custom_call.1} parent=1 // pred_fallthru
      _
    // Predicated region
    $region26: #{tpu_custom_call.1} parent=1 // pred_check
      _
    $region27: #{tpu_custom_call.1} parent=1 // pred_check_branch
      %85 = sbr.rel (0) target = $region29
    $region28: #{tpu_custom_call.1} parent=1 // pred_region
      %87 = dma.done [#allocation6], 4096
    $region29: #{tpu_custom_call.1} parent=1 // pred_fallthru
      _
    // Predicated region
    $region30: #{tpu_custom_call.1} parent=1 // pred_check
      _
    $region31: #{tpu_custom_call.1} parent=1 // pred_check_branch
      %89 = sbr.rel (0) target = $region33
    $region32: #{tpu_custom_call.1} parent=1 // pred_region
      %91 = dma.done [#allocation9], 4096
    $region33: #{tpu_custom_call.1} parent=1 // pred_fallthru
      _
    %s92 = sadd.s32 0, 1
    %s93 = smul.u32 2, %s92
    %s94 = sadd.s32 0, 1
    %s95 = smul.u32 2, %s94
    %v96 = vld [vmem:[#allocation2] sm:$0xff]
    %v97 = vld [vmem:[#allocation2 + $0x8] sm:$0xff]
    %v98 = vld [vmem:[#allocation2 + $0x10] sm:$0xff]
    %v99 = vld [vmem:[#allocation2 + $0x18] sm:$0xff]
    %v100 = vld [vmem:[#allocation2 + $0x20] sm:$0xff]
    %v101 = vld [vmem:[#allocation2 + $0x28] sm:$0xff]
    %v102 = vld [vmem:[#allocation2 + $0x30] sm:$0xff]
    %v103 = vld [vmem:[#allocation2 + $0x38] sm:$0xff]
    %v104 = vld [vmem:[#allocation2 + $0x40] sm:$0xff]
    %v105 = vld [vmem:[#allocation2 + $0x48] sm:$0xff]
    %v106 = vld [vmem:[#allocation2 + $0x50] sm:$0xff]
    %v107 = vld [vmem:[#allocation2 + $0x58] sm:$0xff]
    %v108 = vld [vmem:[#allocation2 + $0x60] sm:$0xff]
    %v109 = vld [vmem:[#allocation2 + $0x68] sm:$0xff]
    %v110 = vld [vmem:[#allocation2 + $0x70] sm:$0xff]
    %v111 = vld [vmem:[#allocation2 + $0x78] sm:$0xff]
    %v112 = vld [vmem:[#allocation2 + $0x80] sm:$0xff]
    %v113 = vld [vmem:[#allocation2 + $0x88] sm:$0xff]
    %v114 = vld [vmem:[#allocation2 + $0x90] sm:$0xff]
    %v115 = vld [vmem:[#allocation2 + $0x98] sm:$0xff]
    %v116 = vld [vmem:[#allocation2 + $0xa0] sm:$0xff]
    %v117 = vld [vmem:[#allocation2 + $0xa8] sm:$0xff]
    %v118 = vld [vmem:[#allocation2 + $0xb0] sm:$0xff]
    %v119 = vld [vmem:[#allocation2 + $0xb8] sm:$0xff]
    %v120 = vld [vmem:[#allocation2 + $0xc0] sm:$0xff]
    %v121 = vld [vmem:[#allocation2 + $0xc8] sm:$0xff]
    %v122 = vld [vmem:[#allocation2 + $0xd0] sm:$0xff]
    %v123 = vld [vmem:[#allocation2 + $0xd8] sm:$0xff]
    %v124 = vld [vmem:[#allocation2 + $0xe0] sm:$0xff]
    %v125 = vld [vmem:[#allocation2 + $0xe8] sm:$0xff]
    %v126 = vld [vmem:[#allocation2 + $0xf0] sm:$0xff]
    %v127 = vld [vmem:[#allocation2 + $0xf8] sm:$0xff]
    %v128 = vld [vmem:[#allocation5] sm:$0xff]
    %v129 = vld [vmem:[#allocation5 + $0x8] sm:$0xff]
    %v130 = vld [vmem:[#allocation5 + $0x10] sm:$0xff]
    %v131 = vld [vmem:[#allocation5 + $0x18] sm:$0xff]
    %v132 = vld [vmem:[#allocation5 + $0x20] sm:$0xff]
    %v133 = vld [vmem:[#allocation5 + $0x28] sm:$0xff]
    %v134 = vld [vmem:[#allocation5 + $0x30] sm:$0xff]
    %v135 = vld [vmem:[#allocation5 + $0x38] sm:$0xff]
    %v136 = vld [vmem:[#allocation5 + $0x40] sm:$0xff]
    %v137 = vld [vmem:[#allocation5 + $0x48] sm:$0xff]
    %v138 = vld [vmem:[#allocation5 + $0x50] sm:$0xff]
    %v139 = vld [vmem:[#allocation5 + $0x58] sm:$0xff]
    %v140 = vld [vmem:[#allocation5 + $0x60] sm:$0xff]
    %v141 = vld [vmem:[#allocation5 + $0x68] sm:$0xff]
    %v142 = vld [vmem:[#allocation5 + $0x70] sm:$0xff]
    %v143 = vld [vmem:[#allocation5 + $0x78] sm:$0xff]
    %v144 = vld [vmem:[#allocation5 + $0x80] sm:$0xff]
    %v145 = vld [vmem:[#allocation5 + $0x88] sm:$0xff]
    %v146 = vld [vmem:[#allocation5 + $0x90] sm:$0xff]
    %v147 = vld [vmem:[#allocation5 + $0x98] sm:$0xff]
    %v148 = vld [vmem:[#allocation5 + $0xa0] sm:$0xff]
    %v149 = vld [vmem:[#allocation5 + $0xa8] sm:$0xff]
    %v150 = vld [vmem:[#allocation5 + $0xb0] sm:$0xff]
    %v151 = vld [vmem:[#allocation5 + $0xb8] sm:$0xff]
    %v152 = vld [vmem:[#allocation5 + $0xc0] sm:$0xff]
    %v153 = vld [vmem:[#allocation5 + $0xc8] sm:$0xff]
    %v154 = vld [vmem:[#allocation5 + $0xd0] sm:$0xff]
    %v155 = vld [vmem:[#allocation5 + $0xd8] sm:$0xff]
    %v156 = vld [vmem:[#allocation5 + $0xe0] sm:$0xff]
    %v157 = vld [vmem:[#allocation5 + $0xe8] sm:$0xff]
    %v158 = vld [vmem:[#allocation5 + $0xf0] sm:$0xff]
    %v159 = vld [vmem:[#allocation5 + $0xf8] sm:$0xff]
    %v160 = vadd.f32 %v96, %v128
    %v161 = vadd.f32 %v97, %v129
    %v162 = vadd.f32 %v98, %v130
    %v163 = vadd.f32 %v99, %v131
    %v164 = vadd.f32 %v100, %v132
    %v165 = vadd.f32 %v101, %v133
    %v166 = vadd.f32 %v102, %v134
    %v167 = vadd.f32 %v103, %v135
    %v168 = vadd.f32 %v104, %v136
    %v169 = vadd.f32 %v105, %v137
    %v170 = vadd.f32 %v106, %v138
    %v171 = vadd.f32 %v107, %v139
    %v172 = vadd.f32 %v108, %v140
    %v173 = vadd.f32 %v109, %v141
    %v174 = vadd.f32 %v110, %v142
    %v175 = vadd.f32 %v111, %v143
    %v176 = vadd.f32 %v112, %v144
    %v177 = vadd.f32 %v113, %v145
    %v178 = vadd.f32 %v114, %v146
    %v179 = vadd.f32 %v115, %v147
    %v180 = vadd.f32 %v116, %v148
    %v181 = vadd.f32 %v117, %v149
    %v182 = vadd.f32 %v118, %v150
    %v183 = vadd.f32 %v119, %v151
    %v184 = vadd.f32 %v120, %v152
    %v185 = vadd.f32 %v121, %v153
    %v186 = vadd.f32 %v122, %v154
    %v187 = vadd.f32 %v123, %v155
    %v188 = vadd.f32 %v124, %v156
    %v189 = vadd.f32 %v125, %v157
    %v190 = vadd.f32 %v126, %v158
    %v191 = vadd.f32 %v127, %v159
    %192 = vst [vmem:[#allocation10] sm:$0xff] %v160
    %193 = vst [vmem:[#allocation10 + $0x8] sm:$0xff] %v161
    %194 = vst [vmem:[#allocation10 + $0x10] sm:$0xff] %v162
    %195 = vst [vmem:[#allocation10 + $0x18] sm:$0xff] %v163
    %196 = vst [vmem:[#allocation10 + $0x20] sm:$0xff] %v164
    %197 = vst [vmem:[#allocation10 + $0x28] sm:$0xff] %v165
    %198 = vst [vmem:[#allocation10 + $0x30] sm:$0xff] %v166
    %199 = vst [vmem:[#allocation10 + $0x38] sm:$0xff] %v167
    %200 = vst [vmem:[#allocation10 + $0x40] sm:$0xff] %v168
    %201 = vst [vmem:[#allocation10 + $0x48] sm:$0xff] %v169
    %202 = vst [vmem:[#allocation10 + $0x50] sm:$0xff] %v170
    %203 = vst [vmem:[#allocation10 + $0x58] sm:$0xff] %v171
    %204 = vst [vmem:[#allocation10 + $0x60] sm:$0xff] %v172
    %205 = vst [vmem:[#allocation10 + $0x68] sm:$0xff] %v173
    %206 = vst [vmem:[#allocation10 + $0x70] sm:$0xff] %v174
    %207 = vst [vmem:[#allocation10 + $0x78] sm:$0xff] %v175
    %208 = vst [vmem:[#allocation10 + $0x80] sm:$0xff] %v176
    %209 = vst [vmem:[#allocation10 + $0x88] sm:$0xff] %v177
    %210 = vst [vmem:[#allocation10 + $0x90] sm:$0xff] %v178
    %211 = vst [vmem:[#allocation10 + $0x98] sm:$0xff] %v179
    %212 = vst [vmem:[#allocation10 + $0xa0] sm:$0xff] %v180
    %213 = vst [vmem:[#allocation10 + $0xa8] sm:$0xff] %v181
    %214 = vst [vmem:[#allocation10 + $0xb0] sm:$0xff] %v182
    %215 = vst [vmem:[#allocation10 + $0xb8] sm:$0xff] %v183
    %216 = vst [vmem:[#allocation10 + $0xc0] sm:$0xff] %v184
    %217 = vst [vmem:[#allocation10 + $0xc8] sm:$0xff] %v185
    %218 = vst [vmem:[#allocation10 + $0xd0] sm:$0xff] %v186
    %219 = vst [vmem:[#allocation10 + $0xd8] sm:$0xff] %v187
    %220 = vst [vmem:[#allocation10 + $0xe0] sm:$0xff] %v188
    %221 = vst [vmem:[#allocation10 + $0xe8] sm:$0xff] %v189
    %222 = vst [vmem:[#allocation10 + $0xf0] sm:$0xff] %v190
    %223 = vst [vmem:[#allocation10 + $0xf8] sm:$0xff] %v191
    %v224 = vld [vmem:[#allocation7] sm:$0xff]
    %v225 = vld [vmem:[#allocation7 + $0x8] sm:$0xff]
    %v226 = vld [vmem:[#allocation7 + $0x10] sm:$0xff]
    %v227 = vld [vmem:[#allocation7 + $0x18] sm:$0xff]
    %v228 = vld [vmem:[#allocation7 + $0x20] sm:$0xff]
    %v229 = vld [vmem:[#allocation7 + $0x28] sm:$0xff]
    %v230 = vld [vmem:[#allocation7 + $0x30] sm:$0xff]
    %v231 = vld [vmem:[#allocation7 + $0x38] sm:$0xff]
    %v232 = vld [vmem:[#allocation7 + $0x40] sm:$0xff]
    %v233 = vld [vmem:[#allocation7 + $0x48] sm:$0xff]
    %v234 = vld [vmem:[#allocation7 + $0x50] sm:$0xff]
    %v235 = vld [vmem:[#allocation7 + $0x58] sm:$0xff]
    %v236 = vld [vmem:[#allocation7 + $0x60] sm:$0xff]
    %v237 = vld [vmem:[#allocation7 + $0x68] sm:$0xff]
    %v238 = vld [vmem:[#allocation7 + $0x70] sm:$0xff]
    %v239 = vld [vmem:[#allocation7 + $0x78] sm:$0xff]
    %v240 = vld [vmem:[#allocation7 + $0x80] sm:$0xff]
    %v241 = vld [vmem:[#allocation7 + $0x88] sm:$0xff]
    %v242 = vld [vmem:[#allocation7 + $0x90] sm:$0xff]
    %v243 = vld [vmem:[#allocation7 + $0x98] sm:$0xff]
    %v244 = vld [vmem:[#allocation7 + $0xa0] sm:$0xff]
    %v245 = vld [vmem:[#allocation7 + $0xa8] sm:$0xff]
    %v246 = vld [vmem:[#allocation7 + $0xb0] sm:$0xff]
    %v247 = vld [vmem:[#allocation7 + $0xb8] sm:$0xff]
    %v248 = vld [vmem:[#allocation7 + $0xc0] sm:$0xff]
    %v249 = vld [vmem:[#allocation7 + $0xc8] sm:$0xff]
    %v250 = vld [vmem:[#allocation7 + $0xd0] sm:$0xff]
    %v251 = vld [vmem:[#allocation7 + $0xd8] sm:$0xff]
    %v252 = vld [vmem:[#allocation7 + $0xe0] sm:$0xff]
    %v253 = vld [vmem:[#allocation7 + $0xe8] sm:$0xff]
    %v254 = vld [vmem:[#allocation7 + $0xf0] sm:$0xff]
    %v255 = vld [vmem:[#allocation7 + $0xf8] sm:$0xff]
    %v256 = vld [vmem:[#allocation8] sm:$0xff]
    %v257 = vld [vmem:[#allocation8 + $0x8] sm:$0xff]
    %v258 = vld [vmem:[#allocation8 + $0x10] sm:$0xff]
    %v259 = vld [vmem:[#allocation8 + $0x18] sm:$0xff]
    %v260 = vld [vmem:[#allocation8 + $0x20] sm:$0xff]
    %v261 = vld [vmem:[#allocation8 + $0x28] sm:$0xff]
    %v262 = vld [vmem:[#allocation8 + $0x30] sm:$0xff]
    %v263 = vld [vmem:[#allocation8 + $0x38] sm:$0xff]
    %v264 = vld [vmem:[#allocation8 + $0x40] sm:$0xff]
    %v265 = vld [vmem:[#allocation8 + $0x48] sm:$0xff]
    %v266 = vld [vmem:[#allocation8 + $0x50] sm:$0xff]
    %v267 = vld [vmem:[#allocation8 + $0x58] sm:$0xff]
    %v268 = vld [vmem:[#allocation8 + $0x60] sm:$0xff]
    %v269 = vld [vmem:[#allocation8 + $0x68] sm:$0xff]
    %v270 = vld [vmem:[#allocation8 + $0x70] sm:$0xff]
    %v271 = vld [vmem:[#allocation8 + $0x78] sm:$0xff]
    %v272 = vld [vmem:[#allocation8 + $0x80] sm:$0xff]
    %v273 = vld [vmem:[#allocation8 + $0x88] sm:$0xff]
    %v274 = vld [vmem:[#allocation8 + $0x90] sm:$0xff]
    %v275 = vld [vmem:[#allocation8 + $0x98] sm:$0xff]
    %v276 = vld [vmem:[#allocation8 + $0xa0] sm:$0xff]
    %v277 = vld [vmem:[#allocation8 + $0xa8] sm:$0xff]
    %v278 = vld [vmem:[#allocation8 + $0xb0] sm:$0xff]
    %v279 = vld [vmem:[#allocation8 + $0xb8] sm:$0xff]
    %v280 = vld [vmem:[#allocation8 + $0xc0] sm:$0xff]
    %v281 = vld [vmem:[#allocation8 + $0xc8] sm:$0xff]
    %v282 = vld [vmem:[#allocation8 + $0xd0] sm:$0xff]
    %v283 = vld [vmem:[#allocation8 + $0xd8] sm:$0xff]
    %v284 = vld [vmem:[#allocation8 + $0xe0] sm:$0xff]
    %v285 = vld [vmem:[#allocation8 + $0xe8] sm:$0xff]
    %v286 = vld [vmem:[#allocation8 + $0xf0] sm:$0xff]
    %v287 = vld [vmem:[#allocation8 + $0xf8] sm:$0xff]
    %v288 = vadd.f32 %v224, %v256
    %v289 = vadd.f32 %v225, %v257
    %v290 = vadd.f32 %v226, %v258
    %v291 = vadd.f32 %v227, %v259
    %v292 = vadd.f32 %v228, %v260
    %v293 = vadd.f32 %v229, %v261
    %v294 = vadd.f32 %v230, %v262
    %v295 = vadd.f32 %v231, %v263
    %v296 = vadd.f32 %v232, %v264
    %v297 = vadd.f32 %v233, %v265
    %v298 = vadd.f32 %v234, %v266
    %v299 = vadd.f32 %v235, %v267
    %v300 = vadd.f32 %v236, %v268
    %v301 = vadd.f32 %v237, %v269
    %v302 = vadd.f32 %v238, %v270
    %v303 = vadd.f32 %v239, %v271
    %v304 = vadd.f32 %v240, %v272
    %v305 = vadd.f32 %v241, %v273
    %v306 = vadd.f32 %v242, %v274
    %v307 = vadd.f32 %v243, %v275
    %v308 = vadd.f32 %v244, %v276
    %v309 = vadd.f32 %v245, %v277
    %v310 = vadd.f32 %v246, %v278
    %v311 = vadd.f32 %v247, %v279
    %v312 = vadd.f32 %v248, %v280
    %v313 = vadd.f32 %v249, %v281
    %v314 = vadd.f32 %v250, %v282
    %v315 = vadd.f32 %v251, %v283
    %v316 = vadd.f32 %v252, %v284
    %v317 = vadd.f32 %v253, %v285
    %v318 = vadd.f32 %v254, %v286
    %v319 = vadd.f32 %v255, %v287
    %320 = vst [vmem:[#allocation11] sm:$0xff] %v288
    %321 = vst [vmem:[#allocation11 + $0x8] sm:$0xff] %v289
    %322 = vst [vmem:[#allocation11 + $0x10] sm:$0xff] %v290
    %323 = vst [vmem:[#allocation11 + $0x18] sm:$0xff] %v291
    %324 = vst [vmem:[#allocation11 + $0x20] sm:$0xff] %v292
    %325 = vst [vmem:[#allocation11 + $0x28] sm:$0xff] %v293
    %326 = vst [vmem:[#allocation11 + $0x30] sm:$0xff] %v294
    %327 = vst [vmem:[#allocation11 + $0x38] sm:$0xff] %v295
    %328 = vst [vmem:[#allocation11 + $0x40] sm:$0xff] %v296
    %329 = vst [vmem:[#allocation11 + $0x48] sm:$0xff] %v297
    %330 = vst [vmem:[#allocation11 + $0x50] sm:$0xff] %v298
    %331 = vst [vmem:[#allocation11 + $0x58] sm:$0xff] %v299
    %332 = vst [vmem:[#allocation11 + $0x60] sm:$0xff] %v300
    %333 = vst [vmem:[#allocation11 + $0x68] sm:$0xff] %v301
    %334 = vst [vmem:[#allocation11 + $0x70] sm:$0xff] %v302
    %335 = vst [vmem:[#allocation11 + $0x78] sm:$0xff] %v303
    %336 = vst [vmem:[#allocation11 + $0x80] sm:$0xff] %v304
    %337 = vst [vmem:[#allocation11 + $0x88] sm:$0xff] %v305
    %338 = vst [vmem:[#allocation11 + $0x90] sm:$0xff] %v306
    %339 = vst [vmem:[#allocation11 + $0x98] sm:$0xff] %v307
    %340 = vst [vmem:[#allocation11 + $0xa0] sm:$0xff] %v308
    %341 = vst [vmem:[#allocation11 + $0xa8] sm:$0xff] %v309
    %342 = vst [vmem:[#allocation11 + $0xb0] sm:$0xff] %v310
    %343 = vst [vmem:[#allocation11 + $0xb8] sm:$0xff] %v311
    %344 = vst [vmem:[#allocation11 + $0xc0] sm:$0xff] %v312
    %345 = vst [vmem:[#allocation11 + $0xc8] sm:$0xff] %v313
    %346 = vst [vmem:[#allocation11 + $0xd0] sm:$0xff] %v314
    %347 = vst [vmem:[#allocation11 + $0xd8] sm:$0xff] %v315
    %348 = vst [vmem:[#allocation11 + $0xe0] sm:$0xff] %v316
    %349 = vst [vmem:[#allocation11 + $0xe8] sm:$0xff] %v317
    %350 = vst [vmem:[#allocation11 + $0xf0] sm:$0xff] %v318
    %351 = vst [vmem:[#allocation11 + $0xf8] sm:$0xff] %v319
    // Predicated region
    $region34: #{tpu_custom_call.1} parent=1 // pred_check
      _
    $region35: #{tpu_custom_call.1} parent=1 // pred_check_branch
      %353 = sbr.rel (0) target = $region37
    $region36: #{tpu_custom_call.1} parent=1 // pred_region
      %355 = vsyncadd [#allocation4], 0
      %s356 = sshll.u32 [#allocation10], 4
      %s357 = int_to_ptr.vmem [resolvable:$true] %s356
      %s358 = sshll.u32 %s4, 4
      %s359 = int_to_ptr.hbm [resolvable:$true] %s358
      %364 = dma.vmem_to_hbm [thread:$0]  %s357, 4096, %s359, [#allocation4], 256, 256, 16
    $region37: #{tpu_custom_call.1} parent=1 // pred_fallthru
      _
    // Predicated region
    $region38: #{tpu_custom_call.1} parent=1 // pred_check
      _
    $region39: #{tpu_custom_call.1} parent=1 // pred_check_branch
      %366 = sbr.rel (0) target = $region41
    $region40: #{tpu_custom_call.1} parent=1 // pred_region
      %368 = vsyncadd [#allocation12], 0
      %s369 = sshll.u32 [#allocation11], 4
      %s370 = int_to_ptr.vmem [resolvable:$true] %s369
      %s371 = sshll.u32 %s5, 4
      %s372 = int_to_ptr.hbm [resolvable:$true] %s371
      %377 = dma.vmem_to_hbm [thread:$0]  %s370, 4096, %s372, [#allocation12], 256, 256, 16
    $region41: #{tpu_custom_call.1} parent=1 // pred_fallthru
      _
    // Predicated region
    $region42: #{tpu_custom_call.1} parent=1 // pred_check
      _
    $region43: #{tpu_custom_call.1} parent=1 // pred_check_branch
      %379 = sbr.rel (0) target = $region45
    $region44: #{tpu_custom_call.1} parent=1 // pred_region
      %381 = dma.done [#allocation4], 4096
    $region45: #{tpu_custom_call.1} parent=1 // pred_fallthru
      _
    // Predicated region
    $region46: #{tpu_custom_call.1} parent=1 // pred_check
      _
    $region47: #{tpu_custom_call.1} parent=1 // pred_check_branch
      %383 = sbr.rel (0) target = $region49
    $region48: #{tpu_custom_call.1} parent=1 // pred_region
      %385 = dma.done [#allocation12], 4096
    $region49: #{tpu_custom_call.1} parent=1 // pred_fallthru
      _
    %386 = vsyncpa [#allocation3], 1
    %387 = vsyncpa [#allocation6], 1
    %388 = vsyncpa [#allocation9], 1
    %389 = vsyncpa [#allocation4], 1
    %390 = vsyncpa [#allocation12], 1

</llo_original>
